<compile_context>
chip_gen: v7x
topology: tpu7x:2x2x1
jax: 0.10.0
libtpu: 0.0.40
codegen_flags: <defaults>
</compile_context>

<pallas_src>
import jax
import jax.numpy as jnp
from jax.experimental import pallas as pl
from jax.experimental.pallas import tpu as pltpu


# --------------------------------------------------------------------------
# Kernel: per-row (= per batch*channel) broadcast scale over the lane axis.
# --------------------------------------------------------------------------
def _scale_kernel(att_ref, x_ref, o_ref):
    # att_ref: (row_tile, 1), x_ref/o_ref: (row_tile, hw_tile).  Same dtype as
    # the feature map, so the multiply runs in the native dtype (bf16 on
    # v6e/v7x, f32 otherwise).
    o_ref[...] = (x_ref[...] * att_ref[...]).astype(o_ref.dtype)


# --------------------------------------------------------------------------
# Per-generation block / VMEM budgets.
# --------------------------------------------------------------------------
def _device_budget():
    """Returns (target_block_bytes, vmem_limit_bytes)."""
    kind = ""
    try:
        kind = jax.devices()[0].device_kind.lower()
    except Exception:
        pass
    if "v7" in kind:                     # 64 MiB physical VMEM, ~3.2 TB/s HBM
        return 8 << 20, 44 << 20
    if "v6" in kind:                     # 128 MiB VMEM, ~1.4 TB/s HBM
        return 8 << 20, 48 << 20
    if "v5" in kind:                     # 16 MiB default scoped VMEM
        return 4 << 20, 24 << 20
    return 4 << 20, 32 << 20


def _choose_tiles(n_rows, hw, itemsize, target_bytes):
    """Pick (row_tile, hw_tile) for a (n_rows, hw) slab.

    hw axis = lanes (multiple of 128, or full extent when hw < 128);
    row axis = sublanes (multiple of 8, or full extent).  Sized so one
    double-buffered step (x in + out + padded att) fits ~4*target_bytes.
    """
    # Lane (last) axis.
    max_lanes = max((target_bytes // (8 * itemsize)) // 128 * 128, 128)
    if hw % 128 == 0:
        hw_tile = min(hw, max_lanes)
    elif hw < 128:
        hw_tile = hw                          # full-extent block
    else:
        hw_tile = min((hw // 128) * 128, max_lanes)   # ragged last block via cdiv

    padded_hw = -(-hw_tile // 128) * 128
    # Sublane axis: budget includes the 128-lane padding of the (rows, 1) att block.
    if n_rows % 8 == 0:
        rows_budget = max(target_bytes // ((padded_hw + 128) * itemsize), 8)
        row_tile = min(n_rows, (rows_budget // 8) * 8)
    else:
        row_tile = n_rows                     # full-extent block

    # Keep at least two grid steps when it is cheap (v7x megacore sharding).
    if (pl.cdiv(n_rows, row_tile) * pl.cdiv(hw, hw_tile) < 2
            and row_tile >= 16 and row_tile % 16 == 0):
        row_tile //= 2
    return row_tile, hw_tile


# --------------------------------------------------------------------------
# Wrapper: full CA_layer forward.
# --------------------------------------------------------------------------
def ca_layer_pallas(feat_nchw, deg, w1, w2, *, negative_slope=0.1,
                    donate_feat=False):
    """feat_nchw: (B, C, H, W).  deg: (B, 256).  w1: (Cr, 256).  w2: (C, Cr)."""
    B, C, H, W = feat_nchw.shape
    HW = H * W
    BC = B * C

    # conv_du on the degradation vector: two tiny bias-free 1x1 convs (matvecs)
    # + LeakyReLU + sigmoid.  Loop-invariant w.r.t. the spatial grid, so it is
    # computed once here in f32 (perf review: hoist out of the per-tile loop).
    h = deg.astype(jnp.float32) @ w1.astype(jnp.float32).T            # (B, Cr)
    h = jnp.where(h > 0, h, jnp.float32(negative_slope) * h)          # LeakyReLU(0.1)
    a = h @ w2.astype(jnp.float32).T                                  # (B, C)
    att = jax.nn.sigmoid(a).astype(feat_nchw.dtype).reshape(BC, 1)    # per-row scale

    x = feat_nchw.reshape(BC, HW)             # metadata-only reshape (contiguous)

    itemsize = feat_nchw.dtype.itemsize
    target_bytes, vmem_limit = _device_budget()
    row_tile, hw_tile = _choose_tiles(BC, HW, itemsize, target_bytes)
    grid = (pl.cdiv(BC, row_tile), pl.cdiv(HW, hw_tile))

    out = pl.pallas_call(
        _scale_kernel,
        out_shape=jax.ShapeDtypeStruct((BC, HW), feat_nchw.dtype),
        grid_spec=pltpu.PrefetchScalarGridSpec(
            num_scalar_prefetch=0,
            grid=grid,
            in_specs=[
                pl.BlockSpec((row_tile, 1), lambda r, t: (r, 0)),        # att column
                pl.BlockSpec((row_tile, hw_tile), lambda r, t: (r, t)),  # feature tile
            ],
            out_specs=pl.BlockSpec((row_tile, hw_tile), lambda r, t: (r, t)),
        ),
        # When the caller can donate the feature map, write the output in place.
        input_output_aliases=({1: 0} if donate_feat else {}),
        compiler_params=pltpu.CompilerParams(
            dimension_semantics=("parallel", "parallel"),
            vmem_limit_bytes=vmem_limit),
    )(att, x)

    return out.reshape(B, C, H, W)


def ca_layer_reference(feat_nchw, deg, w1, w2, *, negative_slope=0.1):
    """Pure-JAX reference (same math as the PyTorch module)."""
    h = deg @ w1.T                                   # (B, Cr)
    h = jnp.where(h > 0, h, negative_slope * h)      # LeakyReLU(0.1)
    a = h @ w2.T                                     # (B, C)
    att = jax.nn.sigmoid(a)
    return feat_nchw * att[:, :, None, None]


if __name__ == "__main__":
    # Module hyper-params: CA_layer(channels_in=64, channels_out=64, reduction=8)
    # NOTE: the first 1x1 conv is hard-coded to 256 input channels in the module,
    # so the degradation representation x[1] must be (B, 256).
    B, C_OUT, H, W = 2, 64, 16, 16
    CHANNELS_IN, REDUCTION, C_DEG = 64, 8, 256
    if CHANNELS_IN // REDUCTION == 0:
        REDUCTION = CHANNELS_IN
    C_RED = CHANNELS_IN // REDUCTION                 # hidden width of conv_du

    key = jax.random.PRNGKey(0)
    kf, kd, kw1, kw2 = jax.random.split(key, 4)

    feat = jax.random.normal(kf, (B, C_OUT, H, W), dtype=jnp.float32)   # x[0]
    deg = jax.random.normal(kd, (B, C_DEG), dtype=jnp.float32)          # x[1]

    # Conv2d weights (out, in, 1, 1) stored squeezed as (out, in); no biases.
    w1 = jax.random.normal(kw1, (C_RED, C_DEG), dtype=jnp.float32) / (C_DEG ** 0.5)
    w2 = jax.random.normal(kw2, (C_OUT, C_RED), dtype=jnp.float32) / (C_RED ** 0.5)

    out = ca_layer_pallas(feat, deg, w1, w2, negative_slope=0.1)
    out = jax.block_until_ready(out)

    ref = ca_layer_reference(feat, deg, w1, w2, negative_slope=0.1)

    assert out.shape == (B, C_OUT, H, W)
    assert jnp.max(jnp.abs(out - ref)) < 1e-4, "mismatch vs reference"
    print("KERNEL_OK")
</pallas_src>

<mosaic_0001>
module attributes {stable_mosaic.version = 11 : i64} {
  func.func @_scale_kernel(%arg0: i32, %arg1: i32, %arg2: memref<64x1xf32, #tpu.memory_space<vmem>>, %arg3: memref<64x256xf32, #tpu.memory_space<vmem>>, %arg4: memref<64x256xf32, #tpu.memory_space<vmem>>) attributes {dimension_semantics = [#tpu.dimension_semantics<parallel>, #tpu.dimension_semantics<parallel>], iteration_bounds = array<i64: 2, 1>, scalar_prefetch = 0 : i64, scratch_operands = 0 : i64, tpu.core_type = #tpu.core_type<tc>, window_params = [{transform_indices = @transform_0, window_bounds = array<i64: 64, 1>}, {transform_indices = @transform_1, window_bounds = array<i64: 64, 256>}, {transform_indices = @transform_2, window_bounds = array<i64: 64, 256>}]} {
    %c0 = arith.constant 0 : index
    %c0_0 = arith.constant 0 : index
    %0 = vector.load %arg3[%c0, %c0_0] : memref<64x256xf32, #tpu.memory_space<vmem>>, vector<64x256xf32>
    %c0_1 = arith.constant 0 : index
    %c0_2 = arith.constant 0 : index
    %1 = vector.load %arg2[%c0_1, %c0_2] : memref<64x1xf32, #tpu.memory_space<vmem>>, vector<64x1xf32>
    %2 = vector.broadcast %1 : vector<64x1xf32> to vector<64x256xf32>
    %3 = arith.mulf %0, %2 : vector<64x256xf32>
    %c0_3 = arith.constant 0 : index
    %c0_4 = arith.constant 0 : index
    %4 = vector.load %arg4[%c0_3, %c0_4] : memref<64x256xf32, #tpu.memory_space<vmem>>, vector<64x256xf32>
    tpu.vector_store %arg4[%c0_3, %c0_4], %3 {strides = array<i32>} : memref<64x256xf32, #tpu.memory_space<vmem>>, vector<64x256xf32>,
    return
  }
  func.func @transform_0(%arg0: i32, %arg1: i32) -> (i32, i32) {
    %c0_i32 = arith.constant 0 : i32
    %c0_i32_0 = arith.constant 0 : i32
    return %arg0, %c0_i32 : i32, i32
  }
  func.func @transform_1(%arg0: i32, %arg1: i32) -> (i32, i32) {
    %c0_i32 = arith.constant 0 : i32
    return %arg0, %arg1 : i32, i32
  }
  func.func @transform_2(%arg0: i32, %arg1: i32) -> (i32, i32) {
    %c0_i32 = arith.constant 0 : i32
    return %arg0, %arg1 : i32, i32
  }
}

</mosaic_0001>

<llo_original>
// kernel: tpu_custom_call.1
$region0: #{tpu_custom_call.1}
  #allocation0 [shape = 'u32[]', space=smem, size = 0x4, offset = 0x4, fixed_abs, tag = 'smem constant byte address 0x4 - core index']
  #allocation1 [shape = 'u32[144,128]{1,0:T(1,128)}', space=vmem, size = 0x12000, scoped, tag = 'internal scratch']
  %s0 = inlined_call_operand.vmem [shape: f32[128,1], index: 0, kind: input, shape index: {}]
  %s1 = inlined_call_operand.hbm [shape: f32[128,256], index: 1, kind: input, shape index: {}]
  %s2 = inlined_call_operand.hbm [shape: f32[128,256], index: 2, kind: output, shape index: {}]
  %s3 = sld [smem:[#allocation0]]
  $region45: #{tpu_custom_call.1} parent=0
    _
  %s5 = ssub.s32 1, %s3
  %s6 = scalar_select 0, %s5, %s3
  $region1: #{tpu_custom_call.1} parent=0
    #allocation2 [shape = 'u8[131072]{0}', space=vmem, size = 0x20000, scoped, tag = 'input window, operand 1']
    #allocation3 [shape = 's32[2]{0}', space=sflag, size = 0x8, scoped, tag = 'scoped memory for tpu_custom_call.1']
    #allocation4 [shape = 's32[2]{0}', space=sflag, size = 0x8, scoped, tag = 'scoped memory for tpu_custom_call.1']
    #allocation5 [shape = 'u8[131072]{0}', space=vmem, size = 0x20000, scoped, tag = 'output window, operand 0']
    %7 = vsyncpa [#allocation3], 0
    %s8 = scalar_lea.sflag [#allocation3], 1
    %9 = vsyncpa %s8, 0
    %10 = vsyncpa [#allocation4], 0
    %s11 = scalar_lea.sflag [#allocation4], 1
    %12 = vsyncpa %s11, 0
    loop: start=0, step=1, limit=4
    $region2: #{tpu_custom_call.1} parent=1 // loop_pre_header
      _
    $region3: #{tpu_custom_call.1} parent=1 // loop_header
      %s14 = sphi 0, %s18
      %p15 = scmp.ge.s32.totalorder %s14, 4
      %s21 = sphi 0, %s33
      %s22 = sphi 0, %s29
      %s23 = sphi 0, %s21
      %s24 = sphi 0, %s22
      %s25 = sphi 0, %s23
      %s26 = sphi 0, %s24
      %s36 = sphi 0, %s38
      %s39 = sphi 0, %s36
      %s40 = sphi 0, %s39
      %s56 = sphi 0, %s40
      %s64 = sphi 0, %s66
      %s67 = sphi 0, %s64
      %s68 = sphi 0, %s67
      %s84 = sphi 0, %s68
      %s92 = sphi 0, %s94
      %s95 = sphi 0, %s92
      %s96 = sphi 0, %s95
      %s112 = sphi 0, %s96
    $region4: #{tpu_custom_call.1} parent=1 // loop_header_branch
      %17 = sbr.rel (%p15) target = $region8
    $region5: #{tpu_custom_call.1} parent=1 // loop_body
      %s19 = ssub.s32 %s14, 1
      %s20 = ssub.s32 %s14, 2
      %s27 = sadd.s32 1, %s22
      %p28 = scmp.ge.s32.totalorder %s27, 1
      %s29 = scalar_select %p28, 0, %s27
      %s30 = sadd.s32 1, %s21
      %s31 = scalar_select %p28, %s30, %s21
      %p32 = scmp.ge.s32.totalorder %s31, 2
      %s33 = scalar_select %p32, 0, %s31
      %s34 = ssub.s32 %s21, %s33
      %p35 = scmp.eq.s32.totalorder %s34, 0
      %s37 = sadd.s32 %s36, 1
      %s38 = scalar_select %p35, %s36, %s37
      %p41 = pneg %p35
      %p42 = scmp.eq.s32.totalorder %s14, 1
      %p43 = por %p41, %p42
      %p44 = scmp.ne.s32.totalorder %s36, %s39
      %p45 = scmp.eq.s32.totalorder %s14, 0
      %p46 = por %p44, %p45
      %p47 = scmp.ne.s32.totalorder %s36, %s39
      %p48 = scmp.eq.s32.totalorder %s19, 1
      %p49 = por %p47, %p48
      %p50 = scmp.ne.s32.totalorder %s39, %s40
      %p51 = scmp.eq.s32.totalorder %s19, 0
      %p52 = por %p50, %p51
      %p53 = scmp.ne.s32.totalorder %s39, %s40
      %p54 = scmp.eq.s32.totalorder %s20, 1
      %p55 = por %p53, %p54
      %p57 = scmp.ne.s32.totalorder %s40, %s56
      %p58 = scmp.eq.s32.totalorder %s20, 0
      %p59 = por %p57, %p58
      %s60 = ssub.s32 %s21, %s33
      %s61 = ssub.s32 %s22, %s29
      %s62 = sor.u32 %s60, %s61
      %p63 = scmp.eq.s32.totalorder %s62, 0
      %s65 = sadd.s32 %s64, 1
      %s66 = scalar_select %p63, %s64, %s65
      %p69 = pneg %p63
      %p70 = scmp.eq.s32.totalorder %s14, 1
      %p71 = por %p69, %p70
      %p72 = scmp.ne.s32.totalorder %s64, %s67
      %p73 = scmp.eq.s32.totalorder %s14, 0
      %p74 = por %p72, %p73
      %p75 = scmp.ne.s32.totalorder %s64, %s67
      %p76 = scmp.eq.s32.totalorder %s19, 1
      %p77 = por %p75, %p76
      %p78 = scmp.ne.s32.totalorder %s67, %s68
      %p79 = scmp.eq.s32.totalorder %s19, 0
      %p80 = por %p78, %p79
      %p81 = scmp.ne.s32.totalorder %s67, %s68
      %p82 = scmp.eq.s32.totalorder %s20, 1
      %p83 = por %p81, %p82
      %p85 = scmp.ne.s32.totalorder %s68, %s84
      %p86 = scmp.eq.s32.totalorder %s20, 0
      %p87 = por %p85, %p86
      %s88 = ssub.s32 %s21, %s33
      %s89 = ssub.s32 %s22, %s29
      %s90 = sor.u32 %s88, %s89
      %p91 = scmp.eq.s32.totalorder %s90, 0
      %s93 = sadd.s32 %s92, 1
      %s94 = scalar_select %p91, %s92, %s93
      %p97 = pneg %p91
      %p98 = scmp.eq.s32.totalorder %s14, 1
      %p99 = por %p97, %p98
      %p100 = scmp.ne.s32.totalorder %s92, %s95
      %p101 = scmp.eq.s32.totalorder %s14, 0
      %p102 = por %p100, %p101
      %p103 = scmp.ne.s32.totalorder %s92, %s95
      %p104 = scmp.eq.s32.totalorder %s19, 1
      %p105 = por %p103, %p104
      %p106 = scmp.ne.s32.totalorder %s95, %s96
      %p107 = scmp.eq.s32.totalorder %s19, 0
      %p108 = por %p106, %p107
      %p109 = scmp.ne.s32.totalorder %s95, %s96
      %p110 = scmp.eq.s32.totalorder %s20, 1
      %p111 = por %p109, %p110
      %p113 = scmp.ne.s32.totalorder %s96, %s112
      %p114 = scmp.eq.s32.totalorder %s20, 0
      %p115 = por %p113, %p114
      %p116 = scmp.le.s32.totalorder 1, %s14
      %p117 = scmp.lt.s32.totalorder %s14, 3
      %p118 = pnand %p116, %p117
      %p119 = pneg %p118
      // Predicated region
      $region9: #{tpu_custom_call.1} parent=5 // pred_check
        _
      $region10: #{tpu_custom_call.1} parent=5 // pred_check_branch
        %121 = sbr.rel (%p118) target = $region12
      $region11: #{tpu_custom_call.1} parent=5 // pred_region
        %s122 = ssub.s32 %s14, 1
      $region12: #{tpu_custom_call.1} parent=5 // pred_fallthru
        _
      %p123 = scmp.lt.s32.totalorder %s14, 2
      // Predicated region
      $region13: #{tpu_custom_call.1} parent=5 // pred_check
        %p124 = pneg %p123
      $region14: #{tpu_custom_call.1} parent=5 // pred_check_branch
        %126 = sbr.rel (%p124) target = $region16
      $region15: #{tpu_custom_call.1} parent=5 // pred_region
        // Predicated region
        $region17: #{tpu_custom_call.1} parent=15 // pred_check
          %p127 = pneg %p46
        $region18: #{tpu_custom_call.1} parent=15 // pred_check_branch
          %129 = sbr.rel (%p127) target = $region20
        $region19: #{tpu_custom_call.1} parent=15 // pred_region
          %s130 = smul.u32 8, %s21
          %p131 = scmp.lt.s32.totalorder %s130, 15
          %s132 = scalar_select %p131, %s130, 15
          %s133 = smul.addr %s132, 8
          %s134 = scalar_lea.vmem %s0, %s133
          %s135 = smul.u32 8, %s21
        $region20: #{tpu_custom_call.1} parent=15 // pred_fallthru
          _
        // Predicated region
        $region21: #{tpu_custom_call.1} parent=15 // pred_check
          %p136 = pneg %p74
        $region22: #{tpu_custom_call.1} parent=15 // pred_check_branch
          %138 = sbr.rel (%p136) target = $region24
        $region23: #{tpu_custom_call.1} parent=15 // pred_region
          %s139 = sand.u32 %s64, 1
          %s140 = scalar_lea.sflag [#allocation3], %s139
          %s141 = sand.u32 %s64, 1
          %s142 = smul.addr %s141, 128
          %s143 = scalar_lea.vmem [#allocation2], %s142
          %s144 = smul.u32 8, %s21
          %s145 = smul.u32 2, %s22
          %s147 = ssub.s32 2048, 2048
          %148 = vsyncadd %s140, %s147
          %s149 = smul.addr %s144, 2
          %s150 = sadd.s32 %s145, %s149
          %s151 = smul.addr %s150, 128
          %s152 = scalar_lea.hbm %s1, %s151
          %s153 = sshll.u32 %s143, 4
          %s154 = int_to_ptr.vmem [resolvable:$true] %s153
          %159 = dma.hbm_to_vmem [thread:$0]  %s152, 2048, %s154, %s140, 256, 256, 16
        $region24: #{tpu_custom_call.1} parent=15 // pred_fallthru
          _
      $region16: #{tpu_custom_call.1} parent=5 // pred_fallthru
        _
      %p160 = scmp.le.s32.totalorder 1, %s14
      %p161 = scmp.lt.s32.totalorder %s14, 3
      %p162 = pnand %p160, %p161
      %p163 = pneg %p162
      // Predicated region
      $region25: #{tpu_custom_call.1} parent=5 // pred_check
        _
      $region26: #{tpu_custom_call.1} parent=5 // pred_check_branch
        %165 = sbr.rel (%p162) target = $region28
      $region27: #{tpu_custom_call.1} parent=5 // pred_region
        %s166 = ssub.s32 %s14, 1
        %s167 = sand.u32 %s67, 1
        %s168 = scalar_lea.sflag [#allocation3], %s167
        %s169 = sand.u32 %s67, 1
        %s170 = smul.addr %s169, 128
        %s171 = scalar_lea.vmem [#allocation2], %s170
        // Predicated region
        $region29: #{tpu_custom_call.1} parent=27 // pred_check
          %p172 = pneg %p80
        $region30: #{tpu_custom_call.1} parent=27 // pred_check_branch
          %174 = sbr.rel (%p172) target = $region32
        $region31: #{tpu_custom_call.1} parent=27 // pred_region
          %175 = dma.done %s168, 2048
        $region32: #{tpu_custom_call.1} parent=27 // pred_fallthru
          _
        %s176 = smul.u32 8, %s23
        %p177 = scmp.lt.s32.totalorder %s176, 15
        %s178 = scalar_select %p177, %s176, 15
        %s179 = smul.addr %s178, 8
        %s180 = scalar_lea.vmem %s0, %s179
        %p181 = pneg %p52
        %p182 = pneg %p49
        %s183 = sand.u32 %s67, 1
        %s184 = scalar_lea.sflag [#allocation3], %s183
        %s185 = sand.u32 %s67, 1
        %s186 = smul.addr %s185, 128
        %s187 = scalar_lea.vmem [#allocation2], %s186
        %p188 = pneg %p80
        %p189 = pneg %p77
        %p190 = pneg %p108
        %p191 = pneg %p105
        %s192 = sand.u32 %s95, 1
        %s193 = scalar_lea.sflag [#allocation4], %s192
        %s194 = sand.u32 %s95, 1
        %s195 = smul.addr %s194, 128
        %s196 = scalar_lea.vmem [#allocation5], %s195
        %s197 = smul.u32 8, %s23
        %p198 = scmp.lt.s32.totalorder %s197, 15
        %s199 = scalar_select %p198, %s197, 15
        %s200 = smul.addr %s199, 8
        %s201 = scalar_lea.vmem %s0, %s200
        %s202 = smul.u32 8, %s23
        %s203 = smul.u32 8, %s23
        %s204 = smul.u32 2, %s24
        %s205 = smul.u32 8, %s23
        %s206 = smul.u32 2, %s24
        %v207 = vld [vmem:[%s171] sm:$0xff]
        %v208 = vld [vmem:[%s171 + $0x8] sm:$0xff]
        %v209 = vld [vmem:[%s171 + $0x10] sm:$0xff]
        %v210 = vld [vmem:[%s171 + $0x18] sm:$0xff]
        %v211 = vld [vmem:[%s171 + $0x20] sm:$0xff]
        %v212 = vld [vmem:[%s171 + $0x28] sm:$0xff]
        %v213 = vld [vmem:[%s171 + $0x30] sm:$0xff]
        %v214 = vld [vmem:[%s171 + $0x38] sm:$0xff]
        %v215 = vld [vmem:[%s171 + $0x40] sm:$0xff]
        %v216 = vld [vmem:[%s171 + $0x48] sm:$0xff]
        %v217 = vld [vmem:[%s171 + $0x50] sm:$0xff]
        %v218 = vld [vmem:[%s171 + $0x58] sm:$0xff]
        %v219 = vld [vmem:[%s171 + $0x60] sm:$0xff]
        %v220 = vld [vmem:[%s171 + $0x68] sm:$0xff]
        %v221 = vld [vmem:[%s171 + $0x70] sm:$0xff]
        %v222 = vld [vmem:[%s171 + $0x78] sm:$0xff]
        %v223 = vld [vmem:[%s201] sm:$0xff]
        %v224 = vld [vmem:[%s201 + $0x8] sm:$0xff]
        %v225 = vld [vmem:[%s201 + $0x10] sm:$0xff]
        %v226 = vld [vmem:[%s201 + $0x18] sm:$0xff]
        %v227 = vld [vmem:[%s201 + $0x20] sm:$0xff]
        %v228 = vld [vmem:[%s201 + $0x28] sm:$0xff]
        %v229 = vld [vmem:[%s201 + $0x30] sm:$0xff]
        %v230 = vld [vmem:[%s201 + $0x38] sm:$0xff]
        %232 = vset.pattern.permute.xlu0 0
        %233 = vperm.xlu0 %232, %v223
        %v234 = vpop.permute.xlu0 %233
        %237 = vset.pattern.permute.xlu0 0
        %238 = vperm.xlu0 %237, %v224
        %v239 = vpop.permute.xlu0 %238
        %242 = vset.pattern.permute.xlu0 0
        %243 = vperm.xlu0 %242, %v225
        %v244 = vpop.permute.xlu0 %243
        %247 = vset.pattern.permute.xlu0 0
        %248 = vperm.xlu0 %247, %v226
        %v249 = vpop.permute.xlu0 %248
        %252 = vset.pattern.permute.xlu0 0
        %253 = vperm.xlu0 %252, %v227
        %v254 = vpop.permute.xlu0 %253
        %257 = vset.pattern.permute.xlu0 0
        %258 = vperm.xlu0 %257, %v228
        %v259 = vpop.permute.xlu0 %258
        %262 = vset.pattern.permute.xlu0 0
        %263 = vperm.xlu0 %262, %v229
        %v264 = vpop.permute.xlu0 %263
        %267 = vset.pattern.permute.xlu0 0
        %268 = vperm.xlu0 %267, %v230
        %v269 = vpop.permute.xlu0 %268
        %v271 = vmul.f32 %v207, %v234
        %v272 = vmul.f32 %v208, %v234
        %v273 = vmul.f32 %v209, %v239
        %v274 = vmul.f32 %v210, %v239
        %v275 = vmul.f32 %v211, %v244
        %v276 = vmul.f32 %v212, %v244
        %v277 = vmul.f32 %v213, %v249
        %v278 = vmul.f32 %v214, %v249
        %v279 = vmul.f32 %v215, %v254
        %v280 = vmul.f32 %v216, %v254
        %v281 = vmul.f32 %v217, %v259
        %v282 = vmul.f32 %v218, %v259
        %v283 = vmul.f32 %v219, %v264
        %v284 = vmul.f32 %v220, %v264
        %v285 = vmul.f32 %v221, %v269
        %v286 = vmul.f32 %v222, %v269
        %287 = vst [vmem:[%s196] sm:$0xff] %v271
        %288 = vst [vmem:[%s196 + $0x8] sm:$0xff] %v272
        %289 = vst [vmem:[%s196 + $0x10] sm:$0xff] %v273
        %290 = vst [vmem:[%s196 + $0x18] sm:$0xff] %v274
        %291 = vst [vmem:[%s196 + $0x20] sm:$0xff] %v275
        %292 = vst [vmem:[%s196 + $0x28] sm:$0xff] %v276
        %293 = vst [vmem:[%s196 + $0x30] sm:$0xff] %v277
        %294 = vst [vmem:[%s196 + $0x38] sm:$0xff] %v278
        %295 = vst [vmem:[%s196 + $0x40] sm:$0xff] %v279
        %296 = vst [vmem:[%s196 + $0x48] sm:$0xff] %v280
        %297 = vst [vmem:[%s196 + $0x50] sm:$0xff] %v281
        %298 = vst [vmem:[%s196 + $0x58] sm:$0xff] %v282
        %299 = vst [vmem:[%s196 + $0x60] sm:$0xff] %v283
        %300 = vst [vmem:[%s196 + $0x68] sm:$0xff] %v284
        %301 = vst [vmem:[%s196 + $0x70] sm:$0xff] %v285
        %302 = vst [vmem:[%s196 + $0x78] sm:$0xff] %v286
        %s303 = sand.u32 %s95, 1
        %s304 = scalar_lea.sflag [#allocation4], %s303
        %s305 = sand.u32 %s95, 1
        %s306 = smul.addr %s305, 128
        %s307 = scalar_lea.vmem [#allocation5], %s306
        // Predicated region
        $region33: #{tpu_custom_call.1} parent=27 // pred_check
          %p308 = pneg %p105
        $region34: #{tpu_custom_call.1} parent=27 // pred_check_branch
          %310 = sbr.rel (%p308) target = $region36
        $region35: #{tpu_custom_call.1} parent=27 // pred_region
          %s311 = smul.u32 8, %s23
          %s312 = smul.u32 2, %s24
          %s314 = ssub.s32 2048, 2048
          %315 = vsyncadd %s304, %s314
          %s316 = smul.addr %s311, 2
          %s317 = sadd.s32 %s312, %s316
          %s318 = smul.addr %s317, 128
          %s319 = scalar_lea.hbm %s2, %s318
          %s320 = sshll.u32 %s307, 4
          %s321 = int_to_ptr.vmem [resolvable:$true] %s320
          %326 = dma.vmem_to_hbm [thread:$0]  %s321, 2048, %s319, %s304, 256, 256, 16
        $region36: #{tpu_custom_call.1} parent=27 // pred_fallthru
          _
      $region28: #{tpu_custom_call.1} parent=5 // pred_fallthru
        _
      %p327 = scmp.le.s32.totalorder 2, %s14
      // Predicated region
      $region37: #{tpu_custom_call.1} parent=5 // pred_check
        %p328 = pneg %p327
      $region38: #{tpu_custom_call.1} parent=5 // pred_check_branch
        %330 = sbr.rel (%p328) target = $region40
      $region39: #{tpu_custom_call.1} parent=5 // pred_region
        %s331 = ssub.s32 %s14, 2
        // Predicated region
        $region41: #{tpu_custom_call.1} parent=39 // pred_check
          %p332 = pneg %p111
        $region42: #{tpu_custom_call.1} parent=39 // pred_check_branch
          %334 = sbr.rel (%p332) target = $region44
        $region43: #{tpu_custom_call.1} parent=39 // pred_region
          %s335 = sand.u32 %s96, 1
          %s336 = scalar_lea.sflag [#allocation4], %s335
          %s337 = sand.u32 %s96, 1
          %s338 = smul.addr %s337, 128
          %s339 = scalar_lea.vmem [#allocation5], %s338
          %340 = dma.done %s336, 2048
        $region44: #{tpu_custom_call.1} parent=39 // pred_fallthru
          _
      $region40: #{tpu_custom_call.1} parent=5 // pred_fallthru
        _
    $region6: #{tpu_custom_call.1} parent=1 // loop_footer
      %s18 = sadd.s32 1, %s14
    $region7: #{tpu_custom_call.1} parent=1 // loop_footer_branch
      %13 = sbr.rel target = $region3
    $region8: #{tpu_custom_call.1} parent=1 // loop_exit
      _
    %341 = vsyncpa [#allocation3], 1
    %s342 = scalar_lea.sflag [#allocation3], 1
    %343 = vsyncpa %s342, 1
    %344 = vsyncpa [#allocation4], 1
    %s345 = scalar_lea.sflag [#allocation4], 1
    %346 = vsyncpa %s345, 1

</llo_original>
